<compile_context>
chip_gen: v7x
topology: tpu7x:2x2x1
jax: 0.10.0
libtpu: 0.0.40
codegen_flags: <defaults>
</compile_context>

<pallas_src>
import functools

import jax
import jax.numpy as jnp
from jax import lax
from jax.experimental import pallas as pl
from jax.experimental.pallas import tpu as pltpu

HIDDEN = 64


def mlp_kernel(x_ref, w1_ref, b1_ref, w2_ref, b2_ref, o_ref, *, inner_lanes):
    """One grid step over a lane-dense batch tile.

    x_ref:  [1, TB]      batch elements on lanes
    w1_ref: [64, 1]      Linear(1,64) weight as a column
    b1_ref: [64, 1]      Linear(1,64) bias as a column
    w2_ref: [8, 64]      Linear(64,1) weight, row 0 real, rows 1..7 zero-padded
    b2_ref: [1, 1]
    o_ref:  [1, TB]
    """
    tb = x_ref.shape[1]
    n_chunks = tb // inner_lanes

    # Hoist loop-invariant parameter loads out of the inner loop.
    w1c = w1_ref[...]   # [64, 1]  -> lane-broadcast inside the loop (VPU)
    b1c = b1_ref[...]   # [64, 1]
    w2p = w2_ref[...]   # [8, 64]
    b2 = b2_ref[...]    # [1, 1]

    def body(c, carry):
        start = pl.multiple_of(c * inner_lanes, inner_lanes)
        x_chunk = x_ref[:, pl.ds(start, inner_lanes)]               # [1, L]
        # Layer 1 on the VPU: h[j, l] = relu(w1[j] * x[l] + b1[j]).  (K=1, so no MXU)
        h = jnp.maximum(w1c * x_chunk + b1c, 0.0)                   # [64, L]
        # Layer 2 on the MXU: [8, 64] @ [64, L] -> [8, L]; only row 0 is real.
        out8 = jnp.dot(w2p, h, preferred_element_type=jnp.float32)  # [8, L]
        out = out8[0:1, :] + b2                                     # [1, L]
        o_ref[:, pl.ds(start, inner_lanes)] = out.astype(o_ref.dtype)
        return carry

    # Keep the per-chunk vreg footprint bounded ([64, inner_lanes] hidden) and
    # give the scheduler a real loop instead of a flat Python unroll.
    lax.fori_loop(0, n_chunks, body, None, unroll=(n_chunks <= 8))


def score_predictor(x, w1_col, b1_col, w2_row, b2, *,
                    inner_lanes=512, max_tile_lanes=32768):
    """x: [B, 1] float32 -> [B, 1] float32 (Linear(1,64) -> ReLU -> Linear(64,1))."""
    B = x.shape[0]

    # Per-grid-step tile of TB batch elements on the lane axis (multiple of inner_lanes),
    # capped so double-buffered in/out tiles stay tiny vs. v7x's 32 MiB scoped VMEM.
    tb = min(max_tile_lanes,
             ((B + inner_lanes - 1) // inner_lanes) * inner_lanes)
    b_pad = ((B + tb - 1) // tb) * tb
    grid = (b_pad // tb,)

    # Batch onto the lane axis, zero-padded; padded lanes are sliced off afterwards.
    x_lanes = jnp.zeros((1, b_pad), jnp.float32).at[0, :B].set(x.reshape(-1))

    # Pad w2 from [1, 64] to [8, 64] (rows 1..7 zero) so the MXU matmul is
    # sublane-aligned; the extra rows cost nothing (MXU minimum granularity).
    w2_pad = jnp.zeros((8, HIDDEN), jnp.float32).at[0, :].set(w2_row.reshape(-1))

    kernel = functools.partial(mlp_kernel, inner_lanes=inner_lanes)

    out_lanes = pl.pallas_call(
        kernel,
        out_shape=jax.ShapeDtypeStruct((1, b_pad), jnp.float32),
        grid=grid,
        in_specs=[
            pl.BlockSpec((1, tb), lambda i: (0, i)),         # x: streamed over batch
            pl.BlockSpec((HIDDEN, 1), lambda i: (0, 0)),     # w1 (pinned)
            pl.BlockSpec((HIDDEN, 1), lambda i: (0, 0)),     # b1 (pinned)
            pl.BlockSpec((8, HIDDEN), lambda i: (0, 0)),     # w2 padded (pinned)
            pl.BlockSpec((1, 1), lambda i: (0, 0)),          # b2 (pinned)
        ],
        out_specs=pl.BlockSpec((1, tb), lambda i: (0, i)),
        compiler_params=pltpu.CompilerParams(
            dimension_semantics=("parallel",)),               # shard batch axis (v7x megacore)
    )(x_lanes, w1_col, b1_col, w2_pad, b2)

    return out_lanes[0, :B].reshape(B, 1)


def init_params(key):
    """Deterministic init mimicking nn.Linear defaults (uniform +/- 1/sqrt(fan_in))."""
    k1, k2, k3, k4 = jax.random.split(key, 4)
    # Linear(1, 64): torch weight [64, 1], bias [64] (stored as a column here).
    bound1 = 1.0
    w1 = jax.random.uniform(k1, (HIDDEN, 1), jnp.float32, -bound1, bound1)
    b1 = jax.random.uniform(k2, (HIDDEN, 1), jnp.float32, -bound1, bound1)
    # Linear(64, 1): torch weight [1, 64], bias [1].
    bound2 = 1.0 / jnp.sqrt(float(HIDDEN))
    w2 = jax.random.uniform(k3, (1, HIDDEN), jnp.float32, -bound2, bound2)
    b2 = jax.random.uniform(k4, (1, 1), jnp.float32, -bound2, bound2)
    return w1, b1, w2, b2


if __name__ == "__main__":
    key = jax.random.PRNGKey(0)
    kx, kp = jax.random.split(key)

    # Small batch of scalar inputs, matching Linear(1, ...): x is [B, 1].
    B = 8
    x = jax.random.normal(kx, (B, 1), jnp.float32)

    w1, b1, w2, b2 = init_params(kp)

    out = score_predictor(x, w1, b1, w2, b2)
    out = jax.block_until_ready(out)

    # Plain-JAX reference (same math as the PyTorch module).
    h_ref = jnp.maximum(x @ w1.T + b1.reshape(1, HIDDEN), 0.0)
    ref = h_ref @ w2.T + b2
    assert out.shape == (B, 1)
    assert jnp.allclose(out, ref, atol=1e-5, rtol=1e-5)

    print("KERNEL_OK")
</pallas_src>

<mosaic_0001>
module attributes {stable_mosaic.version = 11 : i64} {
  func.func @mlp_kernel(%arg0: i32, %arg1: memref<1x512xf32, #tpu.memory_space<vmem>>, %arg2: memref<64x1xf32, #tpu.memory_space<vmem>>, %arg3: memref<64x1xf32, #tpu.memory_space<vmem>>, %arg4: memref<8x64xf32, #tpu.memory_space<vmem>>, %arg5: memref<1x1xf32, #tpu.memory_space<vmem>>, %arg6: memref<1x512xf32, #tpu.memory_space<vmem>>) attributes {dimension_semantics = [#tpu.dimension_semantics<parallel>], iteration_bounds = array<i64: 1>, scalar_prefetch = 0 : i64, scratch_operands = 0 : i64, tpu.core_type = #tpu.core_type<tc>, window_params = [{transform_indices = @transform_0, window_bounds = array<i64: 1, 512>}, {pipeline_mode = #tpu.pipeline_mode<synchronous>, transform_indices = @transform_1, window_bounds = array<i64: 64, 1>}, {pipeline_mode = #tpu.pipeline_mode<synchronous>, transform_indices = @transform_2, window_bounds = array<i64: 64, 1>}, {pipeline_mode = #tpu.pipeline_mode<synchronous>, transform_indices = @transform_3, window_bounds = array<i64: 8, 64>}, {pipeline_mode = #tpu.pipeline_mode<synchronous>, transform_indices = @transform_4, window_bounds = array<i64: 1, 1>}, {transform_indices = @transform_5, window_bounds = array<i64: 1, 512>}]} {
    %c0 = arith.constant 0 : index
    %c0_0 = arith.constant 0 : index
    %0 = vector.load %arg2[%c0, %c0_0] : memref<64x1xf32, #tpu.memory_space<vmem>>, vector<64x1xf32>
    %c0_1 = arith.constant 0 : index
    %c0_2 = arith.constant 0 : index
    %1 = vector.load %arg3[%c0_1, %c0_2] : memref<64x1xf32, #tpu.memory_space<vmem>>, vector<64x1xf32>
    %c0_3 = arith.constant 0 : index
    %c0_4 = arith.constant 0 : index
    %2 = vector.load %arg4[%c0_3, %c0_4] : memref<8x64xf32, #tpu.memory_space<vmem>>, vector<8x64xf32>
    %c0_5 = arith.constant 0 : index
    %c0_6 = arith.constant 0 : index
    %3 = vector.load %arg5[%c0_5, %c0_6] : memref<1x1xf32, #tpu.memory_space<vmem>>, vector<1x1xf32>
    %c0_i32 = arith.constant 0 : i32
    %c512_i32 = arith.constant 512 : i32
    %4 = arith.muli %c0_i32, %c512_i32 : i32
    %5 = tpu.assume_multiple %4, 512 : i32
    %c0_7 = arith.constant 0 : index
    %6 = arith.index_cast %5 : i32 to index
    %7 = vector.load %arg1[%c0_7, %6] : memref<1x512xf32, #tpu.memory_space<vmem>>, vector<1x512xf32>
    %8 = vector.broadcast %0 : vector<64x1xf32> to vector<64x512xf32>
    %9 = vector.broadcast %7 : vector<1x512xf32> to vector<64x512xf32>
    %10 = arith.mulf %8, %9 : vector<64x512xf32>
    %11 = vector.broadcast %1 : vector<64x1xf32> to vector<64x512xf32>
    %12 = arith.addf %10, %11 : vector<64x512xf32>
    %cst = arith.constant 0.000000e+00 : f32
    %13 = vector.broadcast %cst : f32 to vector<64x512xf32>
    %14 = arith.maximumf %12, %13 : vector<64x512xf32>
    %cst_8 = arith.constant dense<0.000000e+00> : vector<8x512xf32>
    %15 = tpu.matmul %2, %14, %cst_8 {dimension_numbers = #tpu.dot_dimension_numbers<[1], [0], [0], [1], [0, 0, 1, 1], [], []>} : vector<8x64xf32>, vector<64x512xf32>, vector<8x512xf32> -> vector<8x512xf32>
    %16 = vector.extract_strided_slice %15 {offsets = [0, 0], sizes = [1, 512], strides = [1, 1]} : vector<8x512xf32> to vector<1x512xf32>
    %17 = vector.broadcast %3 : vector<1x1xf32> to vector<1x512xf32>
    %18 = arith.addf %16, %17 : vector<1x512xf32>
    %c0_9 = arith.constant 0 : index
    %19 = arith.index_cast %5 : i32 to index
    %20 = vector.load %arg6[%c0_9, %19] : memref<1x512xf32, #tpu.memory_space<vmem>>, vector<1x512xf32>
    tpu.vector_store %arg6[%c0_9, %19], %18 {strides = array<i32>} : memref<1x512xf32, #tpu.memory_space<vmem>>, vector<1x512xf32>,
    %c1_i32 = arith.constant 1 : i32
    return
  }
  func.func @transform_0(%arg0: i32) -> (i32, i32) {
    %c0_i32 = arith.constant 0 : i32
    %c0_i32_0 = arith.constant 0 : i32
    return %c0_i32, %arg0 : i32, i32
  }
  func.func @transform_1(%arg0: i32) -> (i32, i32) {
    %c0_i32 = arith.constant 0 : i32
    %c0_i32_0 = arith.constant 0 : i32
    %c0_i32_1 = arith.constant 0 : i32
    return %c0_i32, %c0_i32_0 : i32, i32
  }
  func.func @transform_2(%arg0: i32) -> (i32, i32) {
    %c0_i32 = arith.constant 0 : i32
    %c0_i32_0 = arith.constant 0 : i32
    %c0_i32_1 = arith.constant 0 : i32
    return %c0_i32, %c0_i32_0 : i32, i32
  }
  func.func @transform_3(%arg0: i32) -> (i32, i32) {
    %c0_i32 = arith.constant 0 : i32
    %c0_i32_0 = arith.constant 0 : i32
    %c0_i32_1 = arith.constant 0 : i32
    return %c0_i32, %c0_i32_0 : i32, i32
  }
  func.func @transform_4(%arg0: i32) -> (i32, i32) {
    %c0_i32 = arith.constant 0 : i32
    %c0_i32_0 = arith.constant 0 : i32
    %c0_i32_1 = arith.constant 0 : i32
    return %c0_i32, %c0_i32_0 : i32, i32
  }
  func.func @transform_5(%arg0: i32) -> (i32, i32) {
    %c0_i32 = arith.constant 0 : i32
    %c0_i32_0 = arith.constant 0 : i32
    return %c0_i32, %arg0 : i32, i32
  }
}

</mosaic_0001>

<llo_original>
// kernel: tpu_custom_call.1
$region0: #{tpu_custom_call.1}
  #allocation0 [shape = 'u32[]', space=smem, size = 0x4, offset = 0x4, fixed_abs, tag = 'smem constant byte address 0x4 - core index']
  #allocation1 [shape = 'u32[144,128]{1,0:T(1,128)}', space=vmem, size = 0x12000, scoped, tag = 'internal scratch']
  #allocation2 [shape = 'f32[1,1]{1,0:T(1,128)S(1)}', space=vmem, size = 0x200, scoped, tag = 'scoped memory for tpu_custom_call.1']
  %s0 = inlined_call_operand.vmem [shape: f32[1,512], index: 0, kind: input, shape index: {}]
  %s1 = inlined_call_operand.vmem [shape: f32[64,1], index: 1, kind: input, shape index: {}]
  %s2 = inlined_call_operand.vmem [shape: f32[64,1], index: 2, kind: input, shape index: {}]
  %s3 = inlined_call_operand.vmem [shape: f32[8,64], index: 3, kind: input, shape index: {}]
  %s4 = inlined_call_operand.<no memory space> [shape: f32[1,1], index: 4, kind: input, shape index: {}]
  %s5 = inlined_call_operand.hbm [shape: f32[1,512], index: 5, kind: output, shape index: {}]
  %s6 = sld [smem:[#allocation0]]
  $region30: #{tpu_custom_call.1} parent=0
    _
  %s8 = ssub.s32 1, %s6
  %s9 = scalar_select 0, %s8, %s6
  %v10 = vstv %s4
  %11 = vst [vmem:[#allocation2] sm:$0x1] %v10
  $region1: #{tpu_custom_call.1} parent=0
    #allocation3 [shape = 'u8[2048]{0}', space=vmem, size = 0x800, scoped, tag = 'output window, operand 0, single buffered']
    #allocation4 [shape = 's32[1]{0}', space=sflag, size = 0x4, scoped, tag = 'scoped memory for tpu_custom_call.1']
    %12 = vsyncpa [#allocation4], 0
    // Predicated region
    $region2: #{tpu_custom_call.1} parent=1 // pred_check
      _
    $region3: #{tpu_custom_call.1} parent=1 // pred_check_branch
      %14 = sbr.rel (0) target = $region5
    $region4: #{tpu_custom_call.1} parent=1 // pred_region
      _
    $region5: #{tpu_custom_call.1} parent=1 // pred_fallthru
      _
    // Predicated region
    $region6: #{tpu_custom_call.1} parent=1 // pred_check
      _
    $region7: #{tpu_custom_call.1} parent=1 // pred_check_branch
      %16 = sbr.rel (0) target = $region9
    $region8: #{tpu_custom_call.1} parent=1 // pred_region
      _
    $region9: #{tpu_custom_call.1} parent=1 // pred_fallthru
      _
    // Predicated region
    $region10: #{tpu_custom_call.1} parent=1 // pred_check
      _
    $region11: #{tpu_custom_call.1} parent=1 // pred_check_branch
      %18 = sbr.rel (0) target = $region13
    $region12: #{tpu_custom_call.1} parent=1 // pred_region
      _
    $region13: #{tpu_custom_call.1} parent=1 // pred_fallthru
      _
    // Predicated region
    $region14: #{tpu_custom_call.1} parent=1 // pred_check
      _
    $region15: #{tpu_custom_call.1} parent=1 // pred_check_branch
      %20 = sbr.rel (0) target = $region17
    $region16: #{tpu_custom_call.1} parent=1 // pred_region
      _
    $region17: #{tpu_custom_call.1} parent=1 // pred_fallthru
      _
    // Predicated region
    $region18: #{tpu_custom_call.1} parent=1 // pred_check
      _
    $region19: #{tpu_custom_call.1} parent=1 // pred_check_branch
      %22 = sbr.rel (0) target = $region21
    $region20: #{tpu_custom_call.1} parent=1 // pred_region
      _
    $region21: #{tpu_custom_call.1} parent=1 // pred_fallthru
      _
    %v23 = vld [vmem:[%s1] sm:$0xff]
    %v24 = vld [vmem:[%s1 + $0x8] sm:$0xff]
    %v25 = vld [vmem:[%s1 + $0x10] sm:$0xff]
    %v26 = vld [vmem:[%s1 + $0x18] sm:$0xff]
    %v27 = vld [vmem:[%s1 + $0x20] sm:$0xff]
    %v28 = vld [vmem:[%s1 + $0x28] sm:$0xff]
    %v29 = vld [vmem:[%s1 + $0x30] sm:$0xff]
    %v30 = vld [vmem:[%s1 + $0x38] sm:$0xff]
    %v31 = vld [vmem:[%s2] sm:$0xff]
    %v32 = vld [vmem:[%s2 + $0x8] sm:$0xff]
    %v33 = vld [vmem:[%s2 + $0x10] sm:$0xff]
    %v34 = vld [vmem:[%s2 + $0x18] sm:$0xff]
    %v35 = vld [vmem:[%s2 + $0x20] sm:$0xff]
    %v36 = vld [vmem:[%s2 + $0x28] sm:$0xff]
    %v37 = vld [vmem:[%s2 + $0x30] sm:$0xff]
    %v38 = vld [vmem:[%s2 + $0x38] sm:$0xff]
    %v39 = vld [vmem:[%s3] sm:$0xff]
    %v40 = vld [vmem:[#allocation2] sm:$0x1]
    %v41 = vld [vmem:[%s0] sm:$0xf]
    %43 = vset.pattern.permute.xlu0 0
    %44 = vperm.xlu0 %43, %v23
    %v45 = vpop.permute.xlu0 %44
    %48 = vset.pattern.permute.xlu0 0
    %49 = vperm.xlu0 %48, %v24
    %v50 = vpop.permute.xlu0 %49
    %53 = vset.pattern.permute.xlu0 0
    %54 = vperm.xlu0 %53, %v25
    %v55 = vpop.permute.xlu0 %54
    %58 = vset.pattern.permute.xlu0 0
    %59 = vperm.xlu0 %58, %v26
    %v60 = vpop.permute.xlu0 %59
    %63 = vset.pattern.permute.xlu0 0
    %64 = vperm.xlu0 %63, %v27
    %v65 = vpop.permute.xlu0 %64
    %68 = vset.pattern.permute.xlu0 0
    %69 = vperm.xlu0 %68, %v28
    %v70 = vpop.permute.xlu0 %69
    %73 = vset.pattern.permute.xlu0 0
    %74 = vperm.xlu0 %73, %v29
    %v75 = vpop.permute.xlu0 %74
    %78 = vset.pattern.permute.xlu0 0
    %79 = vperm.xlu0 %78, %v30
    %v80 = vpop.permute.xlu0 %79
    %v83 = vlaneseq
    %v84 = vshrl.u32 %v83, 7
    %v85 = vsub.s32 0, %v84
    %v86 = vrot.slane %v41, %v85
    %v87 = vlaneseq
    %v88 = vshrl.u32 %v87, 7
    %v89 = vsub.s32 1, %v88
    %v90 = vrot.slane %v41, %v89
    %v91 = vlaneseq
    %v92 = vshrl.u32 %v91, 7
    %v93 = vsub.s32 2, %v92
    %v94 = vrot.slane %v41, %v93
    %v95 = vlaneseq
    %v96 = vshrl.u32 %v95, 7
    %v97 = vsub.s32 3, %v96
    %v98 = vrot.slane %v41, %v97
    %v103 = vmul.f32 %v45, %v86
    %v104 = vmul.f32 %v45, %v90
    %v105 = vmul.f32 %v45, %v94
    %v106 = vmul.f32 %v45, %v98
    %v107 = vmul.f32 %v50, %v86
    %v108 = vmul.f32 %v50, %v90
    %v109 = vmul.f32 %v50, %v94
    %v110 = vmul.f32 %v50, %v98
    %v111 = vmul.f32 %v55, %v86
    %v112 = vmul.f32 %v55, %v90
    %v113 = vmul.f32 %v55, %v94
    %v114 = vmul.f32 %v55, %v98
    %v115 = vmul.f32 %v60, %v86
    %v116 = vmul.f32 %v60, %v90
    %v117 = vmul.f32 %v60, %v94
    %v118 = vmul.f32 %v60, %v98
    %v119 = vmul.f32 %v65, %v86
    %v120 = vmul.f32 %v65, %v90
    %v121 = vmul.f32 %v65, %v94
    %v122 = vmul.f32 %v65, %v98
    %v123 = vmul.f32 %v70, %v86
    %v124 = vmul.f32 %v70, %v90
    %v125 = vmul.f32 %v70, %v94
    %v126 = vmul.f32 %v70, %v98
    %v127 = vmul.f32 %v75, %v86
    %v128 = vmul.f32 %v75, %v90
    %v129 = vmul.f32 %v75, %v94
    %v130 = vmul.f32 %v75, %v98
    %v131 = vmul.f32 %v80, %v86
    %v132 = vmul.f32 %v80, %v90
    %v133 = vmul.f32 %v80, %v94
    %v134 = vmul.f32 %v80, %v98
    %136 = vset.pattern.permute.xlu0 0
    %137 = vperm.xlu0 %136, %v31
    %v138 = vpop.permute.xlu0 %137
    %141 = vset.pattern.permute.xlu0 0
    %142 = vperm.xlu0 %141, %v32
    %v143 = vpop.permute.xlu0 %142
    %146 = vset.pattern.permute.xlu0 0
    %147 = vperm.xlu0 %146, %v33
    %v148 = vpop.permute.xlu0 %147
    %151 = vset.pattern.permute.xlu0 0
    %152 = vperm.xlu0 %151, %v34
    %v153 = vpop.permute.xlu0 %152
    %156 = vset.pattern.permute.xlu0 0
    %157 = vperm.xlu0 %156, %v35
    %v158 = vpop.permute.xlu0 %157
    %161 = vset.pattern.permute.xlu0 0
    %162 = vperm.xlu0 %161, %v36
    %v163 = vpop.permute.xlu0 %162
    %166 = vset.pattern.permute.xlu0 0
    %167 = vperm.xlu0 %166, %v37
    %v168 = vpop.permute.xlu0 %167
    %171 = vset.pattern.permute.xlu0 0
    %172 = vperm.xlu0 %171, %v38
    %v173 = vpop.permute.xlu0 %172
    %v175 = vadd.f32 %v103, %v138
    %v176 = vadd.f32 %v104, %v138
    %v177 = vadd.f32 %v105, %v138
    %v178 = vadd.f32 %v106, %v138
    %v179 = vadd.f32 %v107, %v143
    %v180 = vadd.f32 %v108, %v143
    %v181 = vadd.f32 %v109, %v143
    %v182 = vadd.f32 %v110, %v143
    %v183 = vadd.f32 %v111, %v148
    %v184 = vadd.f32 %v112, %v148
    %v185 = vadd.f32 %v113, %v148
    %v186 = vadd.f32 %v114, %v148
    %v187 = vadd.f32 %v115, %v153
    %v188 = vadd.f32 %v116, %v153
    %v189 = vadd.f32 %v117, %v153
    %v190 = vadd.f32 %v118, %v153
    %v191 = vadd.f32 %v119, %v158
    %v192 = vadd.f32 %v120, %v158
    %v193 = vadd.f32 %v121, %v158
    %v194 = vadd.f32 %v122, %v158
    %v195 = vadd.f32 %v123, %v163
    %v196 = vadd.f32 %v124, %v163
    %v197 = vadd.f32 %v125, %v163
    %v198 = vadd.f32 %v126, %v163
    %v199 = vadd.f32 %v127, %v168
    %v200 = vadd.f32 %v128, %v168
    %v201 = vadd.f32 %v129, %v168
    %v202 = vadd.f32 %v130, %v168
    %v203 = vadd.f32 %v131, %v173
    %v204 = vadd.f32 %v132, %v173
    %v205 = vadd.f32 %v133, %v173
    %v206 = vadd.f32 %v134, %v173
    %v207 = vmax.f32 %v175, 0.0
    %v208 = vmax.f32 %v176, 0.0
    %v209 = vmax.f32 %v177, 0.0
    %v210 = vmax.f32 %v178, 0.0
    %v211 = vmax.f32 %v179, 0.0
    %v212 = vmax.f32 %v180, 0.0
    %v213 = vmax.f32 %v181, 0.0
    %v214 = vmax.f32 %v182, 0.0
    %v215 = vmax.f32 %v183, 0.0
    %v216 = vmax.f32 %v184, 0.0
    %v217 = vmax.f32 %v185, 0.0
    %v218 = vmax.f32 %v186, 0.0
    %v219 = vmax.f32 %v187, 0.0
    %v220 = vmax.f32 %v188, 0.0
    %v221 = vmax.f32 %v189, 0.0
    %v222 = vmax.f32 %v190, 0.0
    %v223 = vmax.f32 %v191, 0.0
    %v224 = vmax.f32 %v192, 0.0
    %v225 = vmax.f32 %v193, 0.0
    %v226 = vmax.f32 %v194, 0.0
    %v227 = vmax.f32 %v195, 0.0
    %v228 = vmax.f32 %v196, 0.0
    %v229 = vmax.f32 %v197, 0.0
    %v230 = vmax.f32 %v198, 0.0
    %v231 = vmax.f32 %v199, 0.0
    %v232 = vmax.f32 %v200, 0.0
    %v233 = vmax.f32 %v201, 0.0
    %v234 = vmax.f32 %v202, 0.0
    %v235 = vmax.f32 %v203, 0.0
    %v236 = vmax.f32 %v204, 0.0
    %v237 = vmax.f32 %v205, 0.0
    %v238 = vmax.f32 %v206, 0.0
    %vm239 = vcmask 523264
    %v241 = vsel %vm239, %v39, 0
    %243 = vmatprep.subr.mxu0 %v208
    %244 = vmatpush1.msra.mxu0 %v207
    %245 = vmatprep.subr.mxu0 %v212
    %246 = vmatpush1.msra.mxu0 %v211
    %247 = vmatprep.subr.mxu0 %v216
    %248 = vmatpush1.msra.mxu0 %v215
    %249 = vmatprep.subr.mxu0 %v220
    %250 = vmatpush1.msra.mxu0 %v219
    %251 = vmatprep.subr.mxu0 %v224
    %252 = vmatpush1.msra.mxu0 %v223
    %253 = vmatprep.subr.mxu0 %v228
    %254 = vmatpush1.msra.mxu0 %v227
    %255 = vmatprep.subr.mxu0 %v232
    %256 = vmatpush1.msra.mxu0 %v231
    %257 = vmatprep.subr.mxu0 %v236
    %258 = vmatpush1.msra.mxu0 %v235
    %259 = vmatprep.subr.mxu0 0.0
    %260 = vmatpush1.msra.mxu0 0.0
    %261 = vmatprep.subr.mxu0 0.0
    %262 = vmatpush1.msra.mxu0 0.0
    %263 = vmatprep.subr.mxu0 0.0
    %264 = vmatpush1.msra.mxu0 0.0
    %265 = vmatprep.subr.mxu0 0.0
    %266 = vmatpush1.msra.mxu0 0.0
    %267 = vmatprep.subr.mxu0 0.0
    %268 = vmatpush1.msra.mxu0 0.0
    %269 = vmatprep.subr.mxu0 0.0
    %270 = vmatpush1.msra.mxu0 0.0
    %271 = vmatprep.subr.mxu0 0.0
    %272 = vmatpush1.msra.mxu0 0.0
    %273 = vmatprep.subr.mxu0 0.0
    %274 = vmatpush1.msra.mxu0 0.0
    %275 = vmatprep.subr.mxu0 0.0
    %276 = vmatpush1.msra.mxu0 0.0
    %277 = vmatprep.subr.mxu0 0.0
    %278 = vmatpush1.msra.mxu0 0.0
    %279 = vmatprep.subr.mxu0 0.0
    %280 = vmatpush1.msra.mxu0 0.0
    %281 = vmatprep.subr.mxu0 0.0
    %282 = vmatpush1.msra.mxu0 0.0
    %283 = vmatprep.subr.mxu0 0.0
    %284 = vmatpush1.msra.mxu0 0.0
    %285 = vmatprep.subr.mxu0 0.0
    %286 = vmatpush1.msra.mxu0 0.0
    %287 = vmatprep.subr.mxu0 0.0
    %288 = vmatpush1.msra.mxu0 0.0
    %289 = vmatprep.subr.mxu0 0.0
    %290 = vmatpush1.msra.mxu0 0.0
    %291 = vmatprep.subr.mxu0 0.0
    %292 = vmatpush1.msra.mxu0 0.0
    %293 = vmatprep.subr.mxu0 0.0
    %294 = vmatpush1.msra.mxu0 0.0
    %295 = vmatprep.subr.mxu0 0.0
    %296 = vmatpush1.msra.mxu0 0.0
    %297 = vmatprep.subr.mxu0 0.0
    %298 = vmatpush1.msra.mxu0 0.0
    %299 = vmatprep.subr.mxu0 0.0
    %300 = vmatpush1.msra.mxu0 0.0
    %301 = vmatprep.subr.mxu0 0.0
    %302 = vmatpush1.msra.mxu0 0.0
    %303 = vmatprep.subr.mxu0 0.0
    %304 = vmatpush1.msra.mxu0 0.0
    %305 = vmatprep.subr.mxu0 0.0
    %306 = vmatpush1.msra.mxu0 0.0
    %307 = vmatprep.mubr.f32.mxu0 0.0
    %308 = vmatmul.mubr.f32.gmra.mrb[0].mxu0 %v241
    %v309 = vpop.f32.mrb[0].mxu0
    %v310 = vadd.f32 0.0, %v309
    %v311 = vpop.f32.mrb[0].mxu0
    %v312 = vadd.f32 0.0, %v311
    %313 = vdwg.mxu0
    %314 = vmatprep.subr.mxu0 %v210
    %315 = vmatpush1.msra.mxu0 %v209
    %316 = vmatprep.subr.mxu0 %v214
    %317 = vmatpush1.msra.mxu0 %v213
    %318 = vmatprep.subr.mxu0 %v218
    %319 = vmatpush1.msra.mxu0 %v217
    %320 = vmatprep.subr.mxu0 %v222
    %321 = vmatpush1.msra.mxu0 %v221
    %322 = vmatprep.subr.mxu0 %v226
    %323 = vmatpush1.msra.mxu0 %v225
    %324 = vmatprep.subr.mxu0 %v230
    %325 = vmatpush1.msra.mxu0 %v229
    %326 = vmatprep.subr.mxu0 %v234
    %327 = vmatpush1.msra.mxu0 %v233
    %328 = vmatprep.subr.mxu0 %v238
    %329 = vmatpush1.msra.mxu0 %v237
    %330 = vmatprep.subr.mxu0 0.0
    %331 = vmatpush1.msra.mxu0 0.0
    %332 = vmatprep.subr.mxu0 0.0
    %333 = vmatpush1.msra.mxu0 0.0
    %334 = vmatprep.subr.mxu0 0.0
    %335 = vmatpush1.msra.mxu0 0.0
    %336 = vmatprep.subr.mxu0 0.0
    %337 = vmatpush1.msra.mxu0 0.0
    %338 = vmatprep.subr.mxu0 0.0
    %339 = vmatpush1.msra.mxu0 0.0
    %340 = vmatprep.subr.mxu0 0.0
    %341 = vmatpush1.msra.mxu0 0.0
    %342 = vmatprep.subr.mxu0 0.0
    %343 = vmatpush1.msra.mxu0 0.0
    %344 = vmatprep.subr.mxu0 0.0
    %345 = vmatpush1.msra.mxu0 0.0
    %346 = vmatprep.subr.mxu0 0.0
    %347 = vmatpush1.msra.mxu0 0.0
    %348 = vmatprep.subr.mxu0 0.0
    %349 = vmatpush1.msra.mxu0 0.0
    %350 = vmatprep.subr.mxu0 0.0
    %351 = vmatpush1.msra.mxu0 0.0
    %352 = vmatprep.subr.mxu0 0.0
    %353 = vmatpush1.msra.mxu0 0.0
    %354 = vmatprep.subr.mxu0 0.0
    %355 = vmatpush1.msra.mxu0 0.0
    %356 = vmatprep.subr.mxu0 0.0
    %357 = vmatpush1.msra.mxu0 0.0
    %358 = vmatprep.subr.mxu0 0.0
    %359 = vmatpush1.msra.mxu0 0.0
    %360 = vmatprep.subr.mxu0 0.0
    %361 = vmatpush1.msra.mxu0 0.0
    %362 = vmatprep.subr.mxu0 0.0
    %363 = vmatpush1.msra.mxu0 0.0
    %364 = vmatprep.subr.mxu0 0.0
    %365 = vmatpush1.msra.mxu0 0.0
    %366 = vmatprep.subr.mxu0 0.0
    %367 = vmatpush1.msra.mxu0 0.0
    %368 = vmatprep.subr.mxu0 0.0
    %369 = vmatpush1.msra.mxu0 0.0
    %370 = vmatprep.subr.mxu0 0.0
    %371 = vmatpush1.msra.mxu0 0.0
    %372 = vmatprep.subr.mxu0 0.0
    %373 = vmatpush1.msra.mxu0 0.0
    %374 = vmatprep.subr.mxu0 0.0
    %375 = vmatpush1.msra.mxu0 0.0
    %376 = vmatprep.subr.mxu0 0.0
    %377 = vmatpush1.msra.mxu0 0.0
    %378 = vmatprep.mubr.f32.mxu0 0.0
    %379 = vmatmul.mubr.f32.gmra.mrb[0].mxu0 %v241
    %v380 = vpop.f32.mrb[0].mxu0
    %v381 = vadd.f32 0.0, %v380
    %v382 = vpop.f32.mrb[0].mxu0
    %v383 = vadd.f32 0.0, %v382
    %384 = vdwg.mxu0
    %386 = vset.pattern.permute.xlu0 0
    %387 = vperm.xlu0 %386, %v40
    %v388 = vpop.permute.xlu0 %387
    %v390 = vlaneseq
    %v391 = vshrl.u32 %v390, 7
    %v392 = vsub.s32 0, %v391
    %v393 = vrot.slane %v388, %v392
    %v394 = vadd.f32 %v310, %v393
    %v395 = vadd.f32 %v312, %v393
    %v396 = vadd.f32 %v381, %v393
    %v397 = vadd.f32 %v383, %v393
    %v402 = vcombine.low %v394, %v395
    %v403 = vcombine.low %v396, %v397
    %v405 = vunpack.c.l.s4 1966171168
    %v406 = vunpack.c.0.s8 %v405
    %v407 = vlaneseq
    %v408 = vshrl.u32 %v407, 7
    %v409 = vsub.s32 %v406, %v408
    %v410 = vrot.slane %v402, %v409
    %v412 = vunpack.c.l.s4 1966171168
    %v413 = vunpack.c.0.s8 %v412
    %v414 = vlaneseq
    %v415 = vshrl.u32 %v414, 7
    %v416 = vsub.s32 %v413, %v415
    %v417 = vrot.slane %v403, %v416
    %v418 = vcombine.low %v410, %v417
    %v420 = vunpack.c.l.s4 1966171168
    %v421 = vunpack.c.0.s8 %v420
    %v422 = vlaneseq
    %v423 = vshrl.u32 %v422, 7
    %v424 = vsub.s32 %v421, %v423
    %v425 = vrot.slane %v418, %v424
    %v427 = vlaneseq
    %vm428 = vcmp.ge.s32.totalorder %v427, 0
    %vm429 = vcmp.lt.s32.totalorder %v427, 512
    %vm430 = vmand %vm428, %vm429
    %431 = vst.msk [vmem:[#allocation3] sm:$0xf] %vm430, %v425
    // Predicated region
    $region22: #{tpu_custom_call.1} parent=1 // pred_check
      _
    $region23: #{tpu_custom_call.1} parent=1 // pred_check_branch
      %433 = sbr.rel (0) target = $region25
    $region24: #{tpu_custom_call.1} parent=1 // pred_region
      %s435 = ssub.s32 64, 64
      %436 = vsyncadd [#allocation4], %s435
      %s438 = sshll.u32 [#allocation3], 4
      %s439 = int_to_ptr.vmem [resolvable:$true] %s438
      %441 = dma.vmem_to_hbm [thread:$0]  %s439, 64, %s5, [#allocation4]
    $region25: #{tpu_custom_call.1} parent=1 // pred_fallthru
      _
    // Predicated region
    $region26: #{tpu_custom_call.1} parent=1 // pred_check
      _
    $region27: #{tpu_custom_call.1} parent=1 // pred_check_branch
      %443 = sbr.rel (0) target = $region29
    $region28: #{tpu_custom_call.1} parent=1 // pred_region
      %444 = dma.done [#allocation4], 64
    $region29: #{tpu_custom_call.1} parent=1 // pred_fallthru
      _
    %445 = vsyncpa [#allocation4], 1

</llo_original>
